<compile_context>
chip_gen: v6e
topology: v6e:2x2x1
jax: 0.10.0
libtpu: 0.0.40
codegen_flags: <defaults>
</compile_context>

<pallas_src>
import jax
import jax.numpy as jnp
from jax.experimental import pallas as pl
from jax.experimental.pallas import tpu as pltpu


def _bilinear_matrix(out_size: int, in_size: int, dtype=jnp.float32) -> jnp.ndarray:
    """(out_size, in_size) bilinear interpolation matrix, align_corners=False."""
    scale = in_size / out_size
    o = jnp.arange(out_size, dtype=jnp.float32)
    src = jnp.clip((o + 0.5) * scale - 0.5, 0.0, float(in_size - 1))
    i = jnp.arange(in_size, dtype=jnp.float32)
    # 2-tap "hat" kernel: rows sum to 1, matches the one-hot(i0)/(i1) blend.
    w = jnp.maximum(0.0, 1.0 - jnp.abs(src[:, None] - i[None, :]))
    return w.astype(dtype)


def _cast_to(x, dtype):
    """Round/clip before casting to integer output dtypes (torchvision-like)."""
    if jnp.issubdtype(dtype, jnp.integer):
        info = jnp.iinfo(dtype)
        x = jnp.clip(jnp.round(x), info.min, info.max)
    return x.astype(dtype)


def _choose_planes_per_block(num_planes: int, per_plane_bytes: int,
                             fixed_bytes: int,
                             budget_bytes: int = 24 * 1024 * 1024,
                             p_max: int = 16) -> int:
    """Largest divisor of num_planes fitting the VMEM budget (grid >= 2 preferred)."""
    avail = max(budget_bytes - fixed_bytes, per_plane_bytes)
    cap = max(1, int(avail // max(per_plane_bytes, 1)))
    cap = min(cap, p_max, num_planes)
    if num_planes >= 2:
        cap = min(cap, max(1, num_planes // 2))  # keep >=2 grid steps for megacore
    for p in range(cap, 0, -1):
        if num_planes % p == 0:
            return p
    return 1


def short_edge_resize(imgs: jnp.ndarray, short_edge_size: int,
                      *, compute_dtype=jnp.bfloat16) -> jnp.ndarray:
    """imgs: (n, c, h, w) -> (n, c, new_h, new_w)."""
    n, c, org_h, org_w = imgs.shape
    aspect_ratio = org_h / org_w
    if org_h > org_w:
        new_w = short_edge_size
        new_h = int(aspect_ratio * new_w)
    else:
        new_h = short_edge_size
        new_w = int(new_h / aspect_ratio)

    # Lane-dense output: pad the stored width to a multiple of 128.
    new_w_pad = ((new_w + 127) // 128) * 128

    # Static matmul-order choice (FLOPs of the two contraction orders).
    cost_h_first = new_h * org_w * (org_h + new_w)
    cost_w_first = org_h * new_w * (org_w + new_h)
    w_first = cost_w_first <= cost_h_first

    # Interpolation matrices in the MXU compute dtype (bf16 by default).
    wh = _bilinear_matrix(new_h, org_h, compute_dtype)            # (new_h, H)
    wwt = _bilinear_matrix(new_w, org_w, compute_dtype).T          # (W, new_w)
    wwt = jnp.pad(wwt, ((0, 0), (0, new_w_pad - new_w)))           # (W, new_w_pad)

    num_planes = n * c
    planes = imgs.reshape(num_planes, org_h, org_w)
    out_dtype = imgs.dtype

    # VMEM-aware choice of planes-per-block (double-buffered in/out + f32 temp).
    in_it = jnp.dtype(imgs.dtype).itemsize
    out_it = jnp.dtype(out_dtype).itemsize
    tmp_elems = org_h * new_w_pad if w_first else new_h * org_w
    per_plane = (2 * org_h * org_w * in_it
                 + 2 * new_h * new_w_pad * out_it
                 + 2 * tmp_elems * 4)
    fixed = 2 * (new_h * org_h + org_w * new_w_pad) * jnp.dtype(compute_dtype).itemsize
    P = _choose_planes_per_block(num_planes, per_plane, fixed)

    def kernel(img_ref, wh_ref, wwt_ref, out_ref):
        # img_ref: (P, H, W)   wh_ref: (new_h, H)   wwt_ref: (W, new_w_pad)
        # out_ref: (P, new_h, new_w_pad)
        img = img_ref[...].astype(compute_dtype)
        wh_m = wh_ref[...]
        wwt_m = wwt_ref[...]
        if w_first:
            # Width resize as one big MXU matmul over all P planes.
            t = jnp.dot(img.reshape(P * org_h, org_w), wwt_m,
                        preferred_element_type=jnp.float32)
            t = t.reshape(P, org_h, new_w_pad).astype(compute_dtype)
            for p in range(P):  # height resize per plane (short unrolled loop)
                o = jnp.dot(wh_m, t[p], preferred_element_type=jnp.float32)
                out_ref[p] = _cast_to(o, out_ref.dtype)
        else:
            rows = [jnp.dot(wh_m, img[p], preferred_element_type=jnp.float32)
                    for p in range(P)]
            t = jnp.concatenate(rows, axis=0).astype(compute_dtype)  # (P*new_h, W)
            o = jnp.dot(t, wwt_m, preferred_element_type=jnp.float32)
            out_ref[...] = _cast_to(o.reshape(P, new_h, new_w_pad), out_ref.dtype)

    out = pl.pallas_call(
        kernel,
        out_shape=jax.ShapeDtypeStruct((num_planes, new_h, new_w_pad), out_dtype),
        grid_spec=pltpu.PrefetchScalarGridSpec(
            num_scalar_prefetch=0,
            grid=(num_planes // P,),
            in_specs=[
                pl.BlockSpec((P, org_h, org_w), lambda b: (b, 0, 0)),
                pl.BlockSpec((new_h, org_h), lambda b: (0, 0)),
                pl.BlockSpec((org_w, new_w_pad), lambda b: (0, 0)),
            ],
            out_specs=pl.BlockSpec((P, new_h, new_w_pad), lambda b: (b, 0, 0)),
        ),
        compiler_params=pltpu.CompilerParams(
            dimension_semantics=("parallel",),
            vmem_limit_bytes=48 * 1024 * 1024,
        ),
    )(planes, wh, wwt)

    # Slice off the lane padding and restore (n, c, new_h, new_w).
    return out[:, :, :new_w].reshape(n, c, new_h, new_w)


def _reference_resize(imgs, new_h, new_w):
    """Pure-JAX f32 reference (same bilinear matrices, einsum on host)."""
    _, _, h, w = imgs.shape
    wh = _bilinear_matrix(new_h, h, jnp.float32)
    ww = _bilinear_matrix(new_w, w, jnp.float32)
    return jnp.einsum("oh,nchw,pw->ncop", wh, imgs.astype(jnp.float32), ww)


if __name__ == "__main__":
    key = jax.random.PRNGKey(0)
    short_edge = 8

    # Case 1: h > w  ->  new_w = 8, new_h = int(16/12 * 8) = 10  (w-first order)
    n, c, h, w = 2, 4, 16, 12
    imgs = jax.random.uniform(key, (n, c, h, w), dtype=jnp.float32)

    out = jax.block_until_ready(short_edge_resize(imgs, short_edge))
    assert out.shape == (n, c, 10, 8), out.shape
    ref = _reference_resize(imgs, 10, 8)
    # bf16 MXU inputs with f32 accumulation -> loose tolerance vs f32 reference.
    assert jnp.allclose(out, ref, atol=5e-2, rtol=5e-2)
    assert float(jnp.mean(jnp.abs(out - ref))) < 1.5e-2

    # Same case with f32 compute: must match the reference tightly.
    out_f32 = jax.block_until_ready(
        short_edge_resize(imgs, short_edge, compute_dtype=jnp.float32))
    assert jnp.allclose(out_f32, ref, atol=1e-5, rtol=1e-5)

    # Case 2: h <= w  ->  new_h = 8, new_w = int(8 / (12/16)) = 10  (h-first order)
    imgs2 = jax.random.uniform(jax.random.PRNGKey(1), (n, c, 12, 16),
                               dtype=jnp.float32)
    out2 = jax.block_until_ready(short_edge_resize(imgs2, short_edge))
    assert out2.shape == (n, c, 8, 10), out2.shape
    ref2 = _reference_resize(imgs2, 8, 10)
    assert jnp.allclose(out2, ref2, atol=5e-2, rtol=5e-2)

    print("KERNEL_OK")
</pallas_src>

<mosaic_0001>
module attributes {stable_mosaic.version = 11 : i64} {
  func.func @kernel(%arg0: i32, %arg1: memref<4x16x12xf32, #tpu.memory_space<vmem>>, %arg2: memref<10x16xbf16, #tpu.memory_space<vmem>>, %arg3: memref<12x128xbf16, #tpu.memory_space<vmem>>, %arg4: memref<4x10x128xf32, #tpu.memory_space<vmem>>) attributes {dimension_semantics = [#tpu.dimension_semantics<parallel>], iteration_bounds = array<i64: 2>, scalar_prefetch = 0 : i64, scratch_operands = 0 : i64, tpu.core_type = #tpu.core_type<tc>, window_params = [{transform_indices = @transform_0, window_bounds = array<i64: 4, 16, 12>}, {pipeline_mode = #tpu.pipeline_mode<synchronous>, transform_indices = @transform_1, window_bounds = array<i64: 10, 16>}, {pipeline_mode = #tpu.pipeline_mode<synchronous>, transform_indices = @transform_2, window_bounds = array<i64: 12, 128>}, {transform_indices = @transform_3, window_bounds = array<i64: 4, 10, 128>}]} {
    %c0 = arith.constant 0 : index
    %c0_0 = arith.constant 0 : index
    %c0_1 = arith.constant 0 : index
    %0 = vector.load %arg1[%c0, %c0_0, %c0_1] : memref<4x16x12xf32, #tpu.memory_space<vmem>>, vector<4x16x12xf32>
    %1 = arith.truncf %0 : vector<4x16x12xf32> to vector<4x16x12xbf16>
    %c0_2 = arith.constant 0 : index
    %c0_3 = arith.constant 0 : index
    %2 = vector.load %arg2[%c0_2, %c0_3] : memref<10x16xbf16, #tpu.memory_space<vmem>>, vector<10x16xbf16>
    %c0_4 = arith.constant 0 : index
    %c0_5 = arith.constant 0 : index
    %3 = vector.load %arg3[%c0_4, %c0_5] : memref<12x128xbf16, #tpu.memory_space<vmem>>, vector<12x128xbf16>
    %4 = vector.shape_cast %1 : vector<4x16x12xbf16> to vector<64x12xbf16>
    %cst = arith.constant dense<0.000000e+00> : vector<64x128xf32>
    %5 = tpu.matmul %4, %3, %cst {dimension_numbers = #tpu.dot_dimension_numbers<[1], [0], [0], [1], [0, 0, 1, 1], [], []>} : vector<64x12xbf16>, vector<12x128xbf16>, vector<64x128xf32> -> vector<64x128xf32>
    %6 = vector.shape_cast %5 : vector<64x128xf32> to vector<4x16x128xf32>
    %7 = arith.truncf %6 : vector<4x16x128xf32> to vector<4x16x128xbf16>
    %8 = vector.extract_strided_slice %7 {offsets = [0, 0, 0], sizes = [1, 16, 128], strides = [1, 1, 1]} : vector<4x16x128xbf16> to vector<1x16x128xbf16>
    %9 = vector.shape_cast %8 : vector<1x16x128xbf16> to vector<16x128xbf16>
    %cst_6 = arith.constant dense<0.000000e+00> : vector<10x128xf32>
    %10 = tpu.matmul %2, %9, %cst_6 {dimension_numbers = #tpu.dot_dimension_numbers<[1], [0], [0], [1], [0, 0, 1, 1], [], []>} : vector<10x16xbf16>, vector<16x128xbf16>, vector<10x128xf32> -> vector<10x128xf32>
    %c0_7 = arith.constant 0 : index
    %c0_8 = arith.constant 0 : index
    %c0_9 = arith.constant 0 : index
    %11 = vector.load %arg4[%c0_7, %c0_8, %c0_9] : memref<4x10x128xf32, #tpu.memory_space<vmem>>, vector<1x10x128xf32>
    %12 = vector.shape_cast %11 : vector<1x10x128xf32> to vector<10x128xf32>
    %13 = vector.shape_cast %10 : vector<10x128xf32> to vector<1x10x128xf32>
    tpu.vector_store %arg4[%c0_7, %c0_8, %c0_9], %13 {strides = array<i32>} : memref<4x10x128xf32, #tpu.memory_space<vmem>>, vector<1x10x128xf32>,
    %14 = vector.extract_strided_slice %7 {offsets = [1, 0, 0], sizes = [1, 16, 128], strides = [1, 1, 1]} : vector<4x16x128xbf16> to vector<1x16x128xbf16>
    %15 = vector.shape_cast %14 : vector<1x16x128xbf16> to vector<16x128xbf16>
    %cst_10 = arith.constant dense<0.000000e+00> : vector<10x128xf32>
    %16 = tpu.matmul %2, %15, %cst_10 {dimension_numbers = #tpu.dot_dimension_numbers<[1], [0], [0], [1], [0, 0, 1, 1], [], []>} : vector<10x16xbf16>, vector<16x128xbf16>, vector<10x128xf32> -> vector<10x128xf32>
    %c1 = arith.constant 1 : index
    %c0_11 = arith.constant 0 : index
    %c0_12 = arith.constant 0 : index
    %17 = vector.load %arg4[%c1, %c0_11, %c0_12] : memref<4x10x128xf32, #tpu.memory_space<vmem>>, vector<1x10x128xf32>
    %18 = vector.shape_cast %17 : vector<1x10x128xf32> to vector<10x128xf32>
    %19 = vector.shape_cast %16 : vector<10x128xf32> to vector<1x10x128xf32>
    tpu.vector_store %arg4[%c1, %c0_11, %c0_12], %19 {strides = array<i32>} : memref<4x10x128xf32, #tpu.memory_space<vmem>>, vector<1x10x128xf32>,
    %20 = vector.extract_strided_slice %7 {offsets = [2, 0, 0], sizes = [1, 16, 128], strides = [1, 1, 1]} : vector<4x16x128xbf16> to vector<1x16x128xbf16>
    %21 = vector.shape_cast %20 : vector<1x16x128xbf16> to vector<16x128xbf16>
    %cst_13 = arith.constant dense<0.000000e+00> : vector<10x128xf32>
    %22 = tpu.matmul %2, %21, %cst_13 {dimension_numbers = #tpu.dot_dimension_numbers<[1], [0], [0], [1], [0, 0, 1, 1], [], []>} : vector<10x16xbf16>, vector<16x128xbf16>, vector<10x128xf32> -> vector<10x128xf32>
    %c2 = arith.constant 2 : index
    %c0_14 = arith.constant 0 : index
    %c0_15 = arith.constant 0 : index
    %23 = vector.load %arg4[%c2, %c0_14, %c0_15] : memref<4x10x128xf32, #tpu.memory_space<vmem>>, vector<1x10x128xf32>
    %24 = vector.shape_cast %23 : vector<1x10x128xf32> to vector<10x128xf32>
    %25 = vector.shape_cast %22 : vector<10x128xf32> to vector<1x10x128xf32>
    tpu.vector_store %arg4[%c2, %c0_14, %c0_15], %25 {strides = array<i32>} : memref<4x10x128xf32, #tpu.memory_space<vmem>>, vector<1x10x128xf32>,
    %26 = vector.extract_strided_slice %7 {offsets = [3, 0, 0], sizes = [1, 16, 128], strides = [1, 1, 1]} : vector<4x16x128xbf16> to vector<1x16x128xbf16>
    %27 = vector.shape_cast %26 : vector<1x16x128xbf16> to vector<16x128xbf16>
    %cst_16 = arith.constant dense<0.000000e+00> : vector<10x128xf32>
    %28 = tpu.matmul %2, %27, %cst_16 {dimension_numbers = #tpu.dot_dimension_numbers<[1], [0], [0], [1], [0, 0, 1, 1], [], []>} : vector<10x16xbf16>, vector<16x128xbf16>, vector<10x128xf32> -> vector<10x128xf32>
    %c3 = arith.constant 3 : index
    %c0_17 = arith.constant 0 : index
    %c0_18 = arith.constant 0 : index
    %29 = vector.load %arg4[%c3, %c0_17, %c0_18] : memref<4x10x128xf32, #tpu.memory_space<vmem>>, vector<1x10x128xf32>
    %30 = vector.shape_cast %29 : vector<1x10x128xf32> to vector<10x128xf32>
    %31 = vector.shape_cast %28 : vector<10x128xf32> to vector<1x10x128xf32>
    tpu.vector_store %arg4[%c3, %c0_17, %c0_18], %31 {strides = array<i32>} : memref<4x10x128xf32, #tpu.memory_space<vmem>>, vector<1x10x128xf32>,
    return
  }
  func.func @transform_0(%arg0: i32) -> (i32, i32, i32) {
    %c0_i32 = arith.constant 0 : i32
    %c0_i32_0 = arith.constant 0 : i32
    %c0_i32_1 = arith.constant 0 : i32
    return %arg0, %c0_i32, %c0_i32_0 : i32, i32, i32
  }
  func.func @transform_1(%arg0: i32) -> (i32, i32) {
    %c0_i32 = arith.constant 0 : i32
    %c0_i32_0 = arith.constant 0 : i32
    %c0_i32_1 = arith.constant 0 : i32
    return %c0_i32, %c0_i32_0 : i32, i32
  }
  func.func @transform_2(%arg0: i32) -> (i32, i32) {
    %c0_i32 = arith.constant 0 : i32
    %c0_i32_0 = arith.constant 0 : i32
    %c0_i32_1 = arith.constant 0 : i32
    return %c0_i32, %c0_i32_0 : i32, i32
  }
  func.func @transform_3(%arg0: i32) -> (i32, i32, i32) {
    %c0_i32 = arith.constant 0 : i32
    %c0_i32_0 = arith.constant 0 : i32
    %c0_i32_1 = arith.constant 0 : i32
    return %arg0, %c0_i32, %c0_i32_0 : i32, i32, i32
  }
}

</mosaic_0001>

<llo_original>
// kernel: tpu_custom_call.1
$region0: #{tpu_custom_call.1}
  #allocation0 [shape = 'u32[]', space=smem, size = 0x4, offset = 0x4, fixed_abs, tag = 'smem constant byte address 0x4 - core index']
  #allocation1 [shape = 'u32[144,128]{1,0:T(1,128)}', space=vmem, size = 0x12000, scoped, tag = 'internal scratch']
  %s0 = inlined_call_operand.vmem [shape: f32[8,16,12], index: 0, kind: input, shape index: {}]
  %s1 = inlined_call_operand.vmem [shape: bf16[10,16], index: 1, kind: input, shape index: {}]
  %s2 = inlined_call_operand.vmem [shape: bf16[12,128], index: 2, kind: input, shape index: {}]
  %s3 = inlined_call_operand.vmem [shape: f32[8,10,128], index: 3, kind: output, shape index: {}]
  %s4 = sld [smem:[#allocation0]]
  $region45: #{tpu_custom_call.1} parent=0
    _
  %s6 = ssub.s32 1, %s4
  %s7 = scalar_select 0, %s6, %s4
  loop: start=0, step=1, limit=4
  $region2: #{tpu_custom_call.1} parent=0 // loop_pre_header
    _
  $region3: #{tpu_custom_call.1} parent=0 // loop_header
    %s9 = sphi 0, %s13
    %p10 = scmp.ge.s32.totalorder %s9, 4
    %s19 = sphi 0, %s21
    %s22 = sphi 0, %s19
    %s23 = sphi 0, %s22
    %s39 = sphi 0, %s23
    %s43 = sphi 0, %s43
    %s45 = sphi 0, %s43
    %s46 = sphi 0, %s45
    %s60 = sphi 0, %s46
    %s64 = sphi 0, %s64
    %s66 = sphi 0, %s64
    %s67 = sphi 0, %s66
    %s81 = sphi 0, %s67
    %s87 = sphi 0, %s89
    %s90 = sphi 0, %s87
    %s91 = sphi 0, %s90
    %s107 = sphi 0, %s91
  $region4: #{tpu_custom_call.1} parent=0 // loop_header_branch
    %12 = sbr.rel (%p10) target = $region8
  $region5: #{tpu_custom_call.1} parent=0 // loop_body
    %s14 = ssub.s32 %s9, 1
    %s15 = ssub.s32 %s9, 2
    %s16 = sadd.s32 %s9, 1
    %s17 = ssub.s32 %s9, %s16
    %p18 = scmp.eq.s32.totalorder %s17, 0
    %s20 = sadd.s32 %s19, 1
    %s21 = scalar_select %p18, %s19, %s20
    %p24 = pneg %p18
    %p25 = scmp.eq.s32.totalorder %s9, 1
    %p26 = por %p24, %p25
    %p27 = scmp.ne.s32.totalorder %s19, %s22
    %p28 = scmp.eq.s32.totalorder %s9, 0
    %p29 = por %p27, %p28
    %p30 = scmp.ne.s32.totalorder %s19, %s22
    %p31 = scmp.eq.s32.totalorder %s14, 1
    %p32 = por %p30, %p31
    %p33 = scmp.ne.s32.totalorder %s22, %s23
    %p34 = scmp.eq.s32.totalorder %s14, 0
    %p35 = por %p33, %p34
    %p36 = scmp.ne.s32.totalorder %s22, %s23
    %p37 = scmp.eq.s32.totalorder %s15, 1
    %p38 = por %p36, %p37
    %p40 = scmp.ne.s32.totalorder %s23, %s39
    %p41 = scmp.eq.s32.totalorder %s15, 0
    %p42 = por %p40, %p41
    %s44 = sadd.s32 %s43, 1
    %p47 = scmp.eq.s32.totalorder %s9, 1
    %p48 = scmp.ne.s32.totalorder %s43, %s45
    %p49 = scmp.eq.s32.totalorder %s9, 0
    %p50 = por %p48, %p49
    %p51 = scmp.ne.s32.totalorder %s43, %s45
    %p52 = scmp.eq.s32.totalorder %s14, 1
    %p53 = por %p51, %p52
    %p54 = scmp.ne.s32.totalorder %s45, %s46
    %p55 = scmp.eq.s32.totalorder %s14, 0
    %p56 = por %p54, %p55
    %p57 = scmp.ne.s32.totalorder %s45, %s46
    %p58 = scmp.eq.s32.totalorder %s15, 1
    %p59 = por %p57, %p58
    %p61 = scmp.ne.s32.totalorder %s46, %s60
    %p62 = scmp.eq.s32.totalorder %s15, 0
    %p63 = por %p61, %p62
    %s65 = sadd.s32 %s64, 1
    %p68 = scmp.eq.s32.totalorder %s9, 1
    %p69 = scmp.ne.s32.totalorder %s64, %s66
    %p70 = scmp.eq.s32.totalorder %s9, 0
    %p71 = por %p69, %p70
    %p72 = scmp.ne.s32.totalorder %s64, %s66
    %p73 = scmp.eq.s32.totalorder %s14, 1
    %p74 = por %p72, %p73
    %p75 = scmp.ne.s32.totalorder %s66, %s67
    %p76 = scmp.eq.s32.totalorder %s14, 0
    %p77 = por %p75, %p76
    %p78 = scmp.ne.s32.totalorder %s66, %s67
    %p79 = scmp.eq.s32.totalorder %s15, 1
    %p80 = por %p78, %p79
    %p82 = scmp.ne.s32.totalorder %s67, %s81
    %p83 = scmp.eq.s32.totalorder %s15, 0
    %p84 = por %p82, %p83
    %s85 = ssub.s32 %s9, %s16
    %p86 = scmp.eq.s32.totalorder %s85, 0
    %s88 = sadd.s32 %s87, 1
    %s89 = scalar_select %p86, %s87, %s88
    %p92 = pneg %p86
    %p93 = scmp.eq.s32.totalorder %s9, 1
    %p94 = por %p92, %p93
    %p95 = scmp.ne.s32.totalorder %s87, %s90
    %p96 = scmp.eq.s32.totalorder %s9, 0
    %p97 = por %p95, %p96
    %p98 = scmp.ne.s32.totalorder %s87, %s90
    %p99 = scmp.eq.s32.totalorder %s14, 1
    %p100 = por %p98, %p99
    %p101 = scmp.ne.s32.totalorder %s90, %s91
    %p102 = scmp.eq.s32.totalorder %s14, 0
    %p103 = por %p101, %p102
    %p104 = scmp.ne.s32.totalorder %s90, %s91
    %p105 = scmp.eq.s32.totalorder %s15, 1
    %p106 = por %p104, %p105
    %p108 = scmp.ne.s32.totalorder %s91, %s107
    %p109 = scmp.eq.s32.totalorder %s15, 0
    %p110 = por %p108, %p109
    %p111 = scmp.le.s32.totalorder 1, %s9
    %p112 = scmp.lt.s32.totalorder %s9, 3
    %p113 = pnand %p111, %p112
    %p114 = pneg %p113
    // Predicated region
    $region9: #{tpu_custom_call.1} parent=5 // pred_check
      _
    $region10: #{tpu_custom_call.1} parent=5 // pred_check_branch
      %116 = sbr.rel (%p113) target = $region12
    $region11: #{tpu_custom_call.1} parent=5 // pred_region
      %s117 = ssub.s32 %s9, 1
      // Predicated region
      $region13: #{tpu_custom_call.1} parent=11 // pred_check
        %p118 = pneg %p56
      $region14: #{tpu_custom_call.1} parent=11 // pred_check_branch
        %120 = sbr.rel (%p118) target = $region16
      $region15: #{tpu_custom_call.1} parent=11 // pred_region
        _
      $region16: #{tpu_custom_call.1} parent=11 // pred_fallthru
        _
      // Predicated region
      $region17: #{tpu_custom_call.1} parent=11 // pred_check
        %p121 = pneg %p77
      $region18: #{tpu_custom_call.1} parent=11 // pred_check_branch
        %123 = sbr.rel (%p121) target = $region20
      $region19: #{tpu_custom_call.1} parent=11 // pred_region
        _
      $region20: #{tpu_custom_call.1} parent=11 // pred_fallthru
        _
    $region12: #{tpu_custom_call.1} parent=5 // pred_fallthru
      _
    %p124 = scmp.lt.s32.totalorder %s9, 2
    // Predicated region
    $region21: #{tpu_custom_call.1} parent=5 // pred_check
      %p125 = pneg %p124
    $region22: #{tpu_custom_call.1} parent=5 // pred_check_branch
      %127 = sbr.rel (%p125) target = $region24
    $region23: #{tpu_custom_call.1} parent=5 // pred_region
      // Predicated region
      $region25: #{tpu_custom_call.1} parent=23 // pred_check
        %p128 = pneg %p29
      $region26: #{tpu_custom_call.1} parent=23 // pred_check_branch
        %130 = sbr.rel (%p128) target = $region28
      $region27: #{tpu_custom_call.1} parent=23 // pred_region
        %s131 = smul.u32 4, %s9
        %p132 = scmp.lt.s32.totalorder %s131, 7
        %s133 = scalar_select %p132, %s131, 7
        %s134 = smul.addr %s133, 2
        %s135 = smul.addr %s134, 8
        %s136 = scalar_lea.vmem %s0, %s135
        %s137 = smul.u32 4, %s9
      $region28: #{tpu_custom_call.1} parent=23 // pred_fallthru
        _
    $region24: #{tpu_custom_call.1} parent=5 // pred_fallthru
      _
    %p138 = scmp.le.s32.totalorder 1, %s9
    %p139 = scmp.lt.s32.totalorder %s9, 3
    %p140 = pnand %p138, %p139
    %p141 = pneg %p140
    // Predicated region
    $region29: #{tpu_custom_call.1} parent=5 // pred_check
      _
    $region30: #{tpu_custom_call.1} parent=5 // pred_check_branch
      %143 = sbr.rel (%p140) target = $region32
    $region31: #{tpu_custom_call.1} parent=5 // pred_region
      %s144 = ssub.s32 %s9, 1
      %s145 = smul.u32 4, %s14
      %p146 = scmp.lt.s32.totalorder %s145, 7
      %s147 = scalar_select %p146, %s145, 7
      %s148 = smul.addr %s147, 2
      %s149 = smul.addr %s148, 8
      %s150 = scalar_lea.vmem %s0, %s149
      %p151 = pneg %p35
      %p152 = pneg %p32
      %p153 = pneg %p56
      %p154 = pneg %p53
      %p155 = pneg %p77
      %p156 = pneg %p74
      %p157 = pneg %p103
      %p158 = pneg %p100
      %s159 = smul.u32 4, %s14
      %p160 = scmp.lt.s32.totalorder %s159, 7
      %s161 = scalar_select %p160, %s159, 7
      %s162 = smul.addr %s161, 2
      %s163 = smul.addr %s162, 8
      %s164 = scalar_lea.vmem %s3, %s163
      %s165 = smul.u32 4, %s14
      %p166 = scmp.lt.s32.totalorder %s165, 7
      %s167 = scalar_select %p166, %s165, 7
      %s168 = smul.addr %s167, 2
      %s169 = smul.addr %s168, 8
      %s170 = scalar_lea.vmem %s0, %s169
      %s171 = smul.u32 4, %s14
      %s172 = smul.u32 4, %s14
      %p173 = scmp.lt.s32.totalorder %s172, 7
      %s174 = scalar_select %p173, %s172, 7
      %s175 = smul.addr %s174, 2
      %s176 = smul.addr %s175, 8
      %s177 = scalar_lea.vmem %s3, %s176
      %s178 = smul.u32 4, %s14
      %v180 = vld [vmem:[%s170] sm:$0xff]
      %v181 = vld [vmem:[%s170 + $0x8] sm:$0xff]
      %v182 = vld [vmem:[%s170 + $0x10] sm:$0xff]
      %v183 = vld [vmem:[%s170 + $0x18] sm:$0xff]
      %v184 = vld [vmem:[%s170 + $0x20] sm:$0xff]
      %v185 = vld [vmem:[%s170 + $0x28] sm:$0xff]
      %v186 = vld [vmem:[%s170 + $0x30] sm:$0xff]
      %v187 = vld [vmem:[%s170 + $0x38] sm:$0xff]
      %v188 = vpack.c.bf16 %v181, %v180
      %v189 = vpack.c.bf16 %v183, %v182
      %v190 = vpack.c.bf16 %v185, %v184
      %v191 = vpack.c.bf16 %v187, %v186
      %v192 = vld [vmem:[%s1] sm:$0xf]
      %v193 = vld [vmem:[%s1 + $0x4] sm:$0x1]
      %v194 = vld [vmem:[%s2] sm:$0xf]
      %v195 = vld [vmem:[%s2 + $0x4] sm:$0x3]
      %v198 = vunpack.c.l.b16 %v194
      %v199 = vunpack.c.l.b16 %v195
      %v200 = vpack.c.b16 %v199, %v198
      %vm201 = vcmask 97280
      %v203 = vsel %vm201, %v188, 0
      %v206 = vsel %vm201, %v189, 0
      %v209 = vsel %vm201, %v190, 0
      %v212 = vsel %vm201, %v191, 0
      %vm214 = vcmask 1045504
      %v216 = vsel %vm214, %v200, 0
      %218 = vmatprep.subr.bf16.mxu0 0
      %219 = vmatpush1.bf16.msra.mxu0 0
      %220 = vmatprep.subr.bf16.mxu0 0
      %221 = vmatpush1.bf16.msra.mxu0 0
      %222 = vmatprep.subr.bf16.mxu0 0
      %223 = vmatpush1.bf16.msra.mxu0 0
      %224 = vmatprep.subr.bf16.mxu0 0
      %225 = vmatpush1.bf16.msra.mxu0 0
      %226 = vmatprep.subr.bf16.mxu0 0
      %227 = vmatpush1.bf16.msra.mxu0 0
      %228 = vmatprep.subr.bf16.mxu0 0
      %229 = vmatpush1.bf16.msra.mxu0 0
      %230 = vmatprep.subr.bf16.mxu0 0
      %231 = vmatpush1.bf16.msra.mxu0 0
      %232 = vmatprep.subr.bf16.mxu0 0
      %233 = vmatpush1.bf16.msra.mxu0 %v216
      %234 = vmatprep.subr.bf16.mxu0 0
      %235 = vmatpush2.bf16.msra.mxu0 0
      %236 = vmatprep.subr.bf16.mxu0 0
      %237 = vmatpush2.bf16.msra.mxu0 0
      %238 = vmatprep.subr.bf16.mxu0 0
      %239 = vmatpush2.bf16.msra.mxu0 0
      %240 = vmatprep.subr.bf16.mxu0 0
      %241 = vmatpush2.bf16.msra.mxu0 0
      %242 = vmatprep.subr.bf16.mxu0 0
      %243 = vmatpush2.bf16.msra.mxu0 0
      %244 = vmatprep.subr.bf16.mxu0 0
      %245 = vmatpush2.bf16.msra.mxu0 0
      %246 = vmatprep.subr.bf16.mxu0 0
      %247 = vmatpush2.bf16.msra.mxu0 0
      %248 = vmatprep.subr.bf16.mxu0 0
      %249 = vmatpush2.bf16.msra.mxu0 0
      %250 = vmatprep.mubr.bf16.mxu0 0
      %251 = vmatmul.mubr.bf16.gmra.mxu0 %v203
      %v252 = vpop.f32.mrf.mxu0
      %v253 = vadd.f32 0.0, %v252
      %v254 = vpop.f32.mrf.mxu0
      %v255 = vpop.f32.mrf.mxu0
      %v256 = vadd.f32 0.0, %v255
      %v257 = vpop.f32.mrf.mxu0
      %258 = vmatprep.mubr.bf16.mxu0 0
      %259 = vmatmul.mubr.bf16.gmra.mxu0 %v206
      %v260 = vpop.f32.mrf.mxu0
      %v261 = vadd.f32 0.0, %v260
      %v262 = vpop.f32.mrf.mxu0
      %v263 = vpop.f32.mrf.mxu0
      %v264 = vadd.f32 0.0, %v263
      %v265 = vpop.f32.mrf.mxu0
      %266 = vmatprep.mubr.bf16.mxu0 0
      %267 = vmatmul.mubr.bf16.gmra.mxu0 %v209
      %v268 = vpop.f32.mrf.mxu0
      %v269 = vadd.f32 0.0, %v268
      %v270 = vpop.f32.mrf.mxu0
      %v271 = vpop.f32.mrf.mxu0
      %v272 = vadd.f32 0.0, %v271
      %v273 = vpop.f32.mrf.mxu0
      %274 = vmatprep.mubr.bf16.mxu0 0
      %275 = vmatmul.mubr.bf16.gmra.mxu0 %v212
      %v276 = vpop.f32.mrf.mxu0
      %v277 = vadd.f32 0.0, %v276
      %v278 = vpop.f32.mrf.mxu0
      %v279 = vpop.f32.mrf.mxu0
      %v280 = vadd.f32 0.0, %v279
      %v281 = vpop.f32.mrf.mxu0
      %282 = vdwg.mxu0
      %v283 = vpack.c.bf16 %v256, %v253
      %v284 = vpack.c.bf16 %v264, %v261
      %v285 = vpack.c.bf16 %v272, %v269
      %v286 = vpack.c.bf16 %v280, %v277
      %v289 = vunpack.c.l.b16 %v192
      %v290 = vunpack.c.l.b16 %v193
      %v291 = vpack.c.b16 %v290, %v289
      %vm292 = vcmask 130048
      %v294 = vsel %vm292, %v291, 0
      %296 = vmatprep.subr.bf16.mxu0 0
      %297 = vmatpush1.bf16.msra.mxu0 0
      %298 = vmatprep.subr.bf16.mxu0 0
      %299 = vmatpush1.bf16.msra.mxu0 0
      %300 = vmatprep.subr.bf16.mxu0 0
      %301 = vmatpush1.bf16.msra.mxu0 0
      %302 = vmatprep.subr.bf16.mxu0 0
      %303 = vmatpush1.bf16.msra.mxu0 0
      %304 = vmatprep.subr.bf16.mxu0 0
      %305 = vmatpush1.bf16.msra.mxu0 0
      %306 = vmatprep.subr.bf16.mxu0 0
      %307 = vmatpush1.bf16.msra.mxu0 0
      %308 = vmatprep.subr.bf16.mxu0 0
      %309 = vmatpush1.bf16.msra.mxu0 0
      %310 = vmatprep.subr.bf16.mxu0 0
      %311 = vmatpush1.bf16.msra.mxu0 %v283
      %312 = vmatprep.subr.bf16.mxu0 0
      %313 = vmatpush2.bf16.msra.mxu0 0
      %314 = vmatprep.subr.bf16.mxu0 0
      %315 = vmatpush2.bf16.msra.mxu0 0
      %316 = vmatprep.subr.bf16.mxu0 0
      %317 = vmatpush2.bf16.msra.mxu0 0
      %318 = vmatprep.subr.bf16.mxu0 0
      %319 = vmatpush2.bf16.msra.mxu0 0
      %320 = vmatprep.subr.bf16.mxu0 0
      %321 = vmatpush2.bf16.msra.mxu0 0
      %322 = vmatprep.subr.bf16.mxu0 0
      %323 = vmatpush2.bf16.msra.mxu0 0
      %324 = vmatprep.subr.bf16.mxu0 0
      %325 = vmatpush2.bf16.msra.mxu0 0
      %326 = vmatprep.subr.bf16.mxu0 0
      %327 = vmatpush2.bf16.msra.mxu0 0
      %328 = vmatprep.mubr.bf16.mxu0 0
      %329 = vmatmul.mubr.bf16.gmra.mxu0 %v294
      %v330 = vpop.f32.mrf.mxu0
      %v331 = vadd.f32 0.0, %v330
      %v332 = vpop.f32.mrf.mxu0
      %v333 = vpop.f32.mrf.mxu0
      %v334 = vadd.f32 0.0, %v333
      %v335 = vpop.f32.mrf.mxu0
      %336 = vdwg.mxu0
      %337 = vst [vmem:[%s177] sm:$0xff] %v331
      %338 = vst [vmem:[%s177 + $0x8] sm:$0x3] %v334
      %339 = vmatprep.subr.bf16.mxu0 0
      %340 = vmatpush1.bf16.msra.mxu0 0
      %341 = vmatprep.subr.bf16.mxu0 0
      %342 = vmatpush1.bf16.msra.mxu0 0
      %343 = vmatprep.subr.bf16.mxu0 0
      %344 = vmatpush1.bf16.msra.mxu0 0
      %345 = vmatprep.subr.bf16.mxu0 0
      %346 = vmatpush1.bf16.msra.mxu0 0
      %347 = vmatprep.subr.bf16.mxu0 0
      %348 = vmatpush1.bf16.msra.mxu0 0
      %349 = vmatprep.subr.bf16.mxu0 0
      %350 = vmatpush1.bf16.msra.mxu0 0
      %351 = vmatprep.subr.bf16.mxu0 0
      %352 = vmatpush1.bf16.msra.mxu0 0
      %353 = vmatprep.subr.bf16.mxu0 0
      %354 = vmatpush1.bf16.msra.mxu0 %v284
      %355 = vmatprep.subr.bf16.mxu0 0
      %356 = vmatpush2.bf16.msra.mxu0 0
      %357 = vmatprep.subr.bf16.mxu0 0
      %358 = vmatpush2.bf16.msra.mxu0 0
      %359 = vmatprep.subr.bf16.mxu0 0
      %360 = vmatpush2.bf16.msra.mxu0 0
      %361 = vmatprep.subr.bf16.mxu0 0
      %362 = vmatpush2.bf16.msra.mxu0 0
      %363 = vmatprep.subr.bf16.mxu0 0
      %364 = vmatpush2.bf16.msra.mxu0 0
      %365 = vmatprep.subr.bf16.mxu0 0
      %366 = vmatpush2.bf16.msra.mxu0 0
      %367 = vmatprep.subr.bf16.mxu0 0
      %368 = vmatpush2.bf16.msra.mxu0 0
      %369 = vmatprep.subr.bf16.mxu0 0
      %370 = vmatpush2.bf16.msra.mxu0 0
      %371 = vmatprep.mubr.bf16.mxu0 0
      %372 = vmatmul.mubr.bf16.gmra.mxu0 %v294
      %v373 = vpop.f32.mrf.mxu0
      %v374 = vadd.f32 0.0, %v373
      %v375 = vpop.f32.mrf.mxu0
      %v376 = vpop.f32.mrf.mxu0
      %v377 = vadd.f32 0.0, %v376
      %v378 = vpop.f32.mrf.mxu0
      %379 = vdwg.mxu0
      %s380 = scalar_lea.vmem %s177, 16
      %381 = vst [vmem:[%s380] sm:$0xff] %v374
      %382 = vst [vmem:[%s380 + $0x8] sm:$0x3] %v377
      %383 = vmatprep.subr.bf16.mxu0 0
      %384 = vmatpush1.bf16.msra.mxu0 0
      %385 = vmatprep.subr.bf16.mxu0 0
      %386 = vmatpush1.bf16.msra.mxu0 0
      %387 = vmatprep.subr.bf16.mxu0 0
      %388 = vmatpush1.bf16.msra.mxu0 0
      %389 = vmatprep.subr.bf16.mxu0 0
      %390 = vmatpush1.bf16.msra.mxu0 0
      %391 = vmatprep.subr.bf16.mxu0 0
      %392 = vmatpush1.bf16.msra.mxu0 0
      %393 = vmatprep.subr.bf16.mxu0 0
      %394 = vmatpush1.bf16.msra.mxu0 0
      %395 = vmatprep.subr.bf16.mxu0 0
      %396 = vmatpush1.bf16.msra.mxu0 0
      %397 = vmatprep.subr.bf16.mxu0 0
      %398 = vmatpush1.bf16.msra.mxu0 %v285
      %399 = vmatprep.subr.bf16.mxu0 0
      %400 = vmatpush2.bf16.msra.mxu0 0
      %401 = vmatprep.subr.bf16.mxu0 0
      %402 = vmatpush2.bf16.msra.mxu0 0
      %403 = vmatprep.subr.bf16.mxu0 0
      %404 = vmatpush2.bf16.msra.mxu0 0
      %405 = vmatprep.subr.bf16.mxu0 0
      %406 = vmatpush2.bf16.msra.mxu0 0
      %407 = vmatprep.subr.bf16.mxu0 0
      %408 = vmatpush2.bf16.msra.mxu0 0
      %409 = vmatprep.subr.bf16.mxu0 0
      %410 = vmatpush2.bf16.msra.mxu0 0
      %411 = vmatprep.subr.bf16.mxu0 0
      %412 = vmatpush2.bf16.msra.mxu0 0
      %413 = vmatprep.subr.bf16.mxu0 0
      %414 = vmatpush2.bf16.msra.mxu0 0
      %415 = vmatprep.mubr.bf16.mxu0 0
      %416 = vmatmul.mubr.bf16.gmra.mxu0 %v294
      %v417 = vpop.f32.mrf.mxu0
      %v418 = vadd.f32 0.0, %v417
      %v419 = vpop.f32.mrf.mxu0
      %v420 = vpop.f32.mrf.mxu0
      %v421 = vadd.f32 0.0, %v420
      %v422 = vpop.f32.mrf.mxu0
      %423 = vdwg.mxu0
      %s424 = scalar_lea.vmem %s177, 32
      %425 = vst [vmem:[%s424] sm:$0xff] %v418
      %426 = vst [vmem:[%s424 + $0x8] sm:$0x3] %v421
      %427 = vmatprep.subr.bf16.mxu0 0
      %428 = vmatpush1.bf16.msra.mxu0 0
      %429 = vmatprep.subr.bf16.mxu0 0
      %430 = vmatpush1.bf16.msra.mxu0 0
      %431 = vmatprep.subr.bf16.mxu0 0
      %432 = vmatpush1.bf16.msra.mxu0 0
      %433 = vmatprep.subr.bf16.mxu0 0
      %434 = vmatpush1.bf16.msra.mxu0 0
      %435 = vmatprep.subr.bf16.mxu0 0
      %436 = vmatpush1.bf16.msra.mxu0 0
      %437 = vmatprep.subr.bf16.mxu0 0
      %438 = vmatpush1.bf16.msra.mxu0 0
      %439 = vmatprep.subr.bf16.mxu0 0
      %440 = vmatpush1.bf16.msra.mxu0 0
      %441 = vmatprep.subr.bf16.mxu0 0
      %442 = vmatpush1.bf16.msra.mxu0 %v286
      %443 = vmatprep.subr.bf16.mxu0 0
      %444 = vmatpush2.bf16.msra.mxu0 0
      %445 = vmatprep.subr.bf16.mxu0 0
      %446 = vmatpush2.bf16.msra.mxu0 0
      %447 = vmatprep.subr.bf16.mxu0 0
      %448 = vmatpush2.bf16.msra.mxu0 0
      %449 = vmatprep.subr.bf16.mxu0 0
      %450 = vmatpush2.bf16.msra.mxu0 0
      %451 = vmatprep.subr.bf16.mxu0 0
      %452 = vmatpush2.bf16.msra.mxu0 0
      %453 = vmatprep.subr.bf16.mxu0 0
      %454 = vmatpush2.bf16.msra.mxu0 0
      %455 = vmatprep.subr.bf16.mxu0 0
      %456 = vmatpush2.bf16.msra.mxu0 0
      %457 = vmatprep.subr.bf16.mxu0 0
      %458 = vmatpush2.bf16.msra.mxu0 0
      %459 = vmatprep.mubr.bf16.mxu0 0
      %460 = vmatmul.mubr.bf16.gmra.mxu0 %v294
      %v461 = vpop.f32.mrf.mxu0
      %v462 = vadd.f32 0.0, %v461
      %v463 = vpop.f32.mrf.mxu0
      %v464 = vpop.f32.mrf.mxu0
      %v465 = vadd.f32 0.0, %v464
      %v466 = vpop.f32.mrf.mxu0
      %467 = vdwg.mxu0
      %s468 = scalar_lea.vmem %s177, 48
      %469 = vst [vmem:[%s468] sm:$0xff] %v462
      %470 = vst [vmem:[%s468 + $0x8] sm:$0x3] %v465
      %s471 = smul.u32 4, %s14
      %p472 = scmp.lt.s32.totalorder %s471, 7
      %s473 = scalar_select %p472, %s471, 7
      %s474 = smul.addr %s473, 2
      %s475 = smul.addr %s474, 8
      %s476 = scalar_lea.vmem %s3, %s475
      // Predicated region
      $region33: #{tpu_custom_call.1} parent=31 // pred_check
        %p477 = pneg %p100
      $region34: #{tpu_custom_call.1} parent=31 // pred_check_branch
        %479 = sbr.rel (%p477) target = $region36
      $region35: #{tpu_custom_call.1} parent=31 // pred_region
        %s480 = smul.u32 4, %s14
      $region36: #{tpu_custom_call.1} parent=31 // pred_fallthru
        _
    $region32: #{tpu_custom_call.1} parent=5 // pred_fallthru
      _
    %p481 = scmp.le.s32.totalorder 2, %s9
    // Predicated region
    $region37: #{tpu_custom_call.1} parent=5 // pred_check
      %p482 = pneg %p481
    $region38: #{tpu_custom_call.1} parent=5 // pred_check_branch
      %484 = sbr.rel (%p482) target = $region40
    $region39: #{tpu_custom_call.1} parent=5 // pred_region
      %s485 = ssub.s32 %s9, 2
      // Predicated region
      $region41: #{tpu_custom_call.1} parent=39 // pred_check
        %p486 = pneg %p106
      $region42: #{tpu_custom_call.1} parent=39 // pred_check_branch
        %488 = sbr.rel (%p486) target = $region44
      $region43: #{tpu_custom_call.1} parent=39 // pred_region
        %s489 = smul.u32 4, %s15
        %p490 = scmp.lt.s32.totalorder %s489, 7
        %s491 = scalar_select %p490, %s489, 7
        %s492 = smul.addr %s491, 2
        %s493 = smul.addr %s492, 8
        %s494 = scalar_lea.vmem %s3, %s493
      $region44: #{tpu_custom_call.1} parent=39 // pred_fallthru
        _
    $region40: #{tpu_custom_call.1} parent=5 // pred_fallthru
      _
  $region6: #{tpu_custom_call.1} parent=0 // loop_footer
    %s13 = sadd.s32 1, %s9
  $region7: #{tpu_custom_call.1} parent=0 // loop_footer_branch
    %8 = sbr.rel target = $region3
  $region8: #{tpu_custom_call.1} parent=0 // loop_exit
    _

</llo_original>
